<compile_context>
chip_gen: v7x
topology: tpu7x:2x2x1
jax: 0.10.0
libtpu: 0.0.40
codegen_flags: <defaults>
</compile_context>

<pallas_src>
import functools

import jax
import jax.numpy as jnp
from jax.experimental import pallas as pl
from jax.experimental.pallas import tpu as pltpu


def _round_up(n, m):
    return ((n + m - 1) // m) * m


def _cdiv(a, b):
    return -(-a // b)


def _pass_cell_kernel(x_ref, h_ref, wx_ref, wh_ref, b_ref, wy_ref,
                      o_ref, f_ref, *, hp):
    """One (tb, ·) batch tile.  Weights/bias are single-buffered VMEM residents.

    Fused column layout of wx / wh / b (lane-padded, hp = round_up(hidden,128)):
      [0 : hp)     -> z path (wz_x / wz_h / bz)  -> o_new
      [hp : 2*hp)  -> f path (wu   / wh   / bu)  -> x_temp + h_temp + bu
    """
    cd = wx_ref.dtype                       # MXU input dtype (bf16 or f32)
    x = x_ref[...].astype(cd)               # (tb, in_len)  cast in-kernel (VPU)
    h = h_ref[...].astype(cd)               # (tb, hidden)

    # --- z half first: its sigmoid (EUP) overlaps the f-half MXU pushes below.
    z = (jnp.dot(x, wx_ref[:, :hp], preferred_element_type=jnp.float32)
         + jnp.dot(h, wh_ref[:, :hp], preferred_element_type=jnp.float32)
         + b_ref[:, :hp])
    o_new = jax.nn.sigmoid(z)               # f32

    # --- f half.
    u = (jnp.dot(x, wx_ref[:, hp:], preferred_element_type=jnp.float32)
         + jnp.dot(h, wh_ref[:, hp:], preferred_element_type=jnp.float32)
         + b_ref[:, hp:])
    o_temp = jnp.dot(o_new.astype(cd), wy_ref[...],
                     preferred_element_type=jnp.float32)
    f = jax.nn.sigmoid(u + o_temp)

    o_ref[...] = o_new.astype(o_ref.dtype)
    f_ref[...] = f.astype(f_ref.dtype)


def prepare_params(params, compute_dtype=jnp.bfloat16):
    """One-time weight preparation (call once, reuse across all timesteps).

    Fuses the two shared-LHS weight pairs, zero-pads the OUTPUT (lane) dim of
    every weight/bias to hp = round_up(hidden, 128), zero-pads wy's rows to hp
    (so padded-lane junk in o_new contributes nothing), and casts the matmul
    operands to `compute_dtype`.  Bias stays f32 (added to the f32 accumulator).
    """
    f32 = jnp.float32
    wz_x = jnp.asarray(params["wz_x"], f32)          # (in_len, hidden)
    wz_h = jnp.asarray(params["wz_h"], f32)          # (hidden, hidden)
    wu = jnp.asarray(params["wu"], f32)              # (in_len, hidden)
    wh = jnp.asarray(params["wh"], f32)              # (hidden, hidden)
    wy = jnp.asarray(params["wy"], f32)              # (hidden, hidden)
    bz = jnp.asarray(params["bz"], f32).reshape(1, -1)
    bu = jnp.asarray(params["bu"], f32).reshape(1, -1)

    in_len, hidden = wz_x.shape
    hp = _round_up(hidden, 128)

    def pad_cols(a):
        return jnp.pad(a, ((0, 0), (0, hp - a.shape[1])))

    wx = jnp.concatenate([pad_cols(wz_x), pad_cols(wu)], axis=1)    # (in_len, 2hp)
    whh = jnp.concatenate([pad_cols(wz_h), pad_cols(wh)], axis=1)   # (hidden, 2hp)
    wyp = jnp.pad(wy, ((0, hp - hidden), (0, hp - hidden)))         # (hp, hp)
    b = jnp.concatenate([pad_cols(bz), pad_cols(bu)], axis=1)       # (1, 2hp) f32

    return {
        "wx": wx.astype(compute_dtype),
        "wh": whh.astype(compute_dtype),
        "wy": wyp.astype(compute_dtype),
        "b": b,
    }


@functools.partial(jax.jit, static_argnames=("block_b",))
def pass_cell_2(x, o, h, prepared, *, block_b=512):
    """Pallas implementation of PASScell_2.forward(x, o, h) -> (o, f).

    `o` is accepted for interface fidelity but is not read (the PyTorch forward
    overwrites it before use).  `prepared` comes from prepare_params().
    """
    del o  # unused by the reference forward
    B, in_len = x.shape
    hidden = h.shape[1]

    wx, wh, b, wy = prepared["wx"], prepared["wh"], prepared["b"], prepared["wy"]
    hp = wy.shape[1]
    assert wx.shape == (in_len, 2 * hp), (wx.shape, in_len, hp)
    assert wh.shape == (hidden, 2 * hp), (wh.shape, hidden, hp)
    assert b.shape == (1, 2 * hp)

    # Batch tiling: tb multiple of 8, batch padding bounded by one tile.
    b8 = _round_up(B, 8)
    n_tiles = _cdiv(b8, max(8, block_b))
    tb = _round_up(_cdiv(b8, n_tiles), 8)
    bp = n_tiles * tb

    # Only batch-pad when needed (no lane padding of the activation streams).
    x_p = x if bp == B else jnp.pad(x, ((0, bp - B), (0, 0)))
    h_p = h if bp == B else jnp.pad(h, ((0, bp - B), (0, 0)))

    # VMEM budget derived from the actual buffer set:
    #   weights/bias x1 (Buffered(1)) + 2x (tb,in_len)+(tb,hidden) activation
    #   buffers + 2x two (tb,hp) f32 output buffers + f32 working temporaries.
    w_itemsize = jnp.dtype(wx.dtype).itemsize
    needed = int(1.25 * (
        (wx.size + wh.size + wy.size) * w_itemsize + b.size * 4
        + 2 * tb * in_len * jnp.dtype(x.dtype).itemsize
        + 2 * tb * hidden * jnp.dtype(h.dtype).itemsize
        + 2 * 2 * tb * hp * 4
        + 6 * tb * hp * 4))
    try:
        vmem_cap = int(pltpu.get_tpu_info().vmem_capacity_bytes)
    except Exception:  # pragma: no cover - conservative fallback
        vmem_cap = 64 * 1024 * 1024
    vmem_limit = min(max(needed, 32 * 1024 * 1024),
                     max(32 * 1024 * 1024, (vmem_cap * 3) // 4))

    grid = (bp // tb,)

    def resident(shape):
        # Constant index_map -> stays in VMEM across grid steps; single buffer.
        return pl.BlockSpec(shape, lambda i: (0, 0),
                            pipeline_mode=pl.Buffered(1))

    in_specs = [
        pl.BlockSpec((tb, in_len), lambda i: (i, 0)),   # x stream (unpadded lanes)
        pl.BlockSpec((tb, hidden), lambda i: (i, 0)),   # h stream (unpadded lanes)
        resident((in_len, 2 * hp)),                     # wx = [wz_x | wu]
        resident((hidden, 2 * hp)),                     # wh = [wz_h | wh]
        resident((1, 2 * hp)),                          # b  = [bz   | bu], f32
        resident((hp, hp)),                             # wy
    ]
    out_spec = pl.BlockSpec((tb, hp), lambda i: (i, 0))

    # TODO(synk): for very large hidden (resident weights > VMEM even in bf16),
    # add a second grid axis over the fused output columns instead of shrinking tb.
    o_new, f = pl.pallas_call(
        functools.partial(_pass_cell_kernel, hp=hp),
        out_shape=(jax.ShapeDtypeStruct((bp, hp), jnp.float32),
                   jax.ShapeDtypeStruct((bp, hp), jnp.float32)),
        grid=grid,
        in_specs=in_specs,
        out_specs=(out_spec, out_spec),
        compiler_params=pltpu.CompilerParams(
            dimension_semantics=("parallel",),
            vmem_limit_bytes=vmem_limit),
    )(x_p, h_p, wx, wh, b, wy)

    if bp == B and hp == hidden:      # aligned fast path: no slice copy
        return o_new, f
    return o_new[:B, :hidden], f[:B, :hidden]


def init_params(key, input_length, hidden_length):
    """Deterministic synthetic parameters with the nn.Linear shapes.

    PyTorch stores weight as (out, in); we keep the transposed (in, out) form.
    linear_i_z2 acts on cat([h, x]), so its weight is split into the h-rows
    (wz_h) and x-rows (wz_x).
    """
    ks = jax.random.split(key, 6)
    s = 0.1
    wz_t = s * jax.random.normal(
        ks[0], (hidden_length + input_length, hidden_length), jnp.float32)
    return {
        "wz_h": wz_t[:hidden_length, :],
        "wz_x": wz_t[hidden_length:, :],
        "bz": s * jax.random.normal(ks[1], (1, hidden_length), jnp.float32),
        "wu": s * jax.random.normal(ks[2], (input_length, hidden_length), jnp.float32),
        "bu": s * jax.random.normal(ks[3], (1, hidden_length), jnp.float32),
        "wh": s * jax.random.normal(ks[4], (hidden_length, hidden_length), jnp.float32),
        "wy": s * jax.random.normal(ks[5], (hidden_length, hidden_length), jnp.float32),
    }


def pass_cell_2_ref(x, o, h, params):
    """Pure-JAX reference mirroring the PyTorch forward, for verification."""
    del o
    z_temp = h @ params["wz_h"] + x @ params["wz_x"] + params["bz"]
    o_new = jax.nn.sigmoid(z_temp)
    f = jax.nn.sigmoid(x @ params["wu"] + params["bu"]
                       + h @ params["wh"] + o_new @ params["wy"])
    return o_new, f


if __name__ == "__main__":
    input_length = 3
    hidden_length = 20
    batch = 8

    key = jax.random.PRNGKey(0)
    k_x, k_o, k_h, k_p = jax.random.split(key, 4)

    x = jax.random.normal(k_x, (batch, input_length), jnp.float32)
    o_in = jax.random.normal(k_o, (batch, hidden_length), jnp.float32)
    h = jax.random.normal(k_h, (batch, hidden_length), jnp.float32)
    params = init_params(k_p, input_length, hidden_length)

    o_ref_, f_ref_ = pass_cell_2_ref(x, o_in, h, params)

    # 1) f32 MXU inputs: matches the reference tightly.
    prep_f32 = prepare_params(params, compute_dtype=jnp.float32)
    o_out, f_out = pass_cell_2(x, o_in, h, prep_f32)
    jax.block_until_ready((o_out, f_out))
    assert o_out.shape == (batch, hidden_length)
    assert f_out.shape == (batch, hidden_length)
    assert jnp.allclose(o_out, o_ref_, atol=1e-5, rtol=1e-5)
    assert jnp.allclose(f_out, f_ref_, atol=1e-5, rtol=1e-5)

    # 2) Default bf16 MXU inputs (f32 accumulate / f32 activations): looser tol.
    prep_bf16 = prepare_params(params)          # compute_dtype=bfloat16 default
    o_bf, f_bf = pass_cell_2(x, o_in, h, prep_bf16)
    jax.block_until_ready((o_bf, f_bf))
    assert jnp.allclose(o_bf, o_ref_, atol=2e-2, rtol=2e-2)
    assert jnp.allclose(f_bf, f_ref_, atol=2e-2, rtol=2e-2)

    # 3) Ragged batch + multi-step grid: exercises batch padding/tiling and the
    #    single-buffered VMEM-resident weights across grid steps.
    xb = jax.random.normal(jax.random.PRNGKey(1), (37, input_length), jnp.float32)
    hb = jax.random.normal(jax.random.PRNGKey(2), (37, hidden_length), jnp.float32)
    ob = jnp.zeros((37, hidden_length), jnp.float32)
    o_g, f_g = pass_cell_2(xb, ob, hb, prep_f32, block_b=8)
    jax.block_until_ready((o_g, f_g))
    o_gr, f_gr = pass_cell_2_ref(xb, ob, hb, params)
    assert jnp.allclose(o_g, o_gr, atol=1e-5, rtol=1e-5)
    assert jnp.allclose(f_g, f_gr, atol=1e-5, rtol=1e-5)

    # TODO(synk): final_activation (ReLU) is declared in the PyTorch module but
    # never used in forward(), so it is intentionally not implemented.

    print("KERNEL_OK")
</pallas_src>

<mosaic_0001>
module attributes {stable_mosaic.version = 11 : i64} {
  func.func @_pass_cell_kernel(%arg0: i32, %arg1: memref<8x3xf32, #tpu.memory_space<vmem>>, %arg2: memref<8x20xf32, #tpu.memory_space<vmem>>, %arg3: memref<3x256xf32, #tpu.memory_space<vmem>>, %arg4: memref<20x256xf32, #tpu.memory_space<vmem>>, %arg5: memref<1x256xf32, #tpu.memory_space<vmem>>, %arg6: memref<128x128xf32, #tpu.memory_space<vmem>>, %arg7: memref<8x128xf32, #tpu.memory_space<vmem>>, %arg8: memref<8x128xf32, #tpu.memory_space<vmem>>) attributes {dimension_semantics = [#tpu.dimension_semantics<parallel>], iteration_bounds = array<i64: 1>, scalar_prefetch = 0 : i64, scratch_operands = 0 : i64, tpu.core_type = #tpu.core_type<tc>, window_params = [{transform_indices = @transform_0, window_bounds = array<i64: 8, 3>}, {transform_indices = @transform_1, window_bounds = array<i64: 8, 20>}, {pipeline_mode = #tpu.pipeline_mode<synchronous>, transform_indices = @transform_2, window_bounds = array<i64: 3, 256>}, {pipeline_mode = #tpu.pipeline_mode<synchronous>, transform_indices = @transform_3, window_bounds = array<i64: 20, 256>}, {pipeline_mode = #tpu.pipeline_mode<synchronous>, transform_indices = @transform_4, window_bounds = array<i64: 1, 256>}, {pipeline_mode = #tpu.pipeline_mode<synchronous>, transform_indices = @transform_5, window_bounds = array<i64: 128, 128>}, {transform_indices = @transform_6, window_bounds = array<i64: 8, 128>}, {transform_indices = @transform_7, window_bounds = array<i64: 8, 128>}]} {
    %c0 = arith.constant 0 : index
    %c0_0 = arith.constant 0 : index
    %0 = vector.load %arg1[%c0, %c0_0] : memref<8x3xf32, #tpu.memory_space<vmem>>, vector<8x3xf32>
    %c0_1 = arith.constant 0 : index
    %c0_2 = arith.constant 0 : index
    %1 = vector.load %arg2[%c0_1, %c0_2] : memref<8x20xf32, #tpu.memory_space<vmem>>, vector<8x20xf32>
    %c0_3 = arith.constant 0 : index
    %c0_4 = arith.constant 0 : index
    %2 = vector.load %arg3[%c0_3, %c0_4] : memref<3x256xf32, #tpu.memory_space<vmem>>, vector<3x128xf32>
    %cst = arith.constant dense<0.000000e+00> : vector<8x128xf32>
    %3 = tpu.matmul %0, %2, %cst {dimension_numbers = #tpu.dot_dimension_numbers<[1], [0], [0], [1], [0, 0, 1, 1], [], []>} : vector<8x3xf32>, vector<3x128xf32>, vector<8x128xf32> -> vector<8x128xf32>
    %c0_5 = arith.constant 0 : index
    %c0_6 = arith.constant 0 : index
    %4 = vector.load %arg4[%c0_5, %c0_6] : memref<20x256xf32, #tpu.memory_space<vmem>>, vector<20x128xf32>
    %cst_7 = arith.constant dense<0.000000e+00> : vector<8x128xf32>
    %5 = tpu.matmul %1, %4, %cst_7 {dimension_numbers = #tpu.dot_dimension_numbers<[1], [0], [0], [1], [0, 0, 1, 1], [], []>} : vector<8x20xf32>, vector<20x128xf32>, vector<8x128xf32> -> vector<8x128xf32>
    %6 = arith.addf %3, %5 : vector<8x128xf32>
    %c0_8 = arith.constant 0 : index
    %c0_9 = arith.constant 0 : index
    %7 = vector.load %arg5[%c0_8, %c0_9] : memref<1x256xf32, #tpu.memory_space<vmem>>, vector<1x128xf32>
    %8 = vector.broadcast %7 : vector<1x128xf32> to vector<8x128xf32>
    %9 = arith.addf %6, %8 : vector<8x128xf32>
    %10 = arith.negf %9 : vector<8x128xf32>
    %11 = math.exp %10 : vector<8x128xf32>
    %cst_10 = arith.constant 1.000000e+00 : f32
    %12 = vector.broadcast %cst_10 : f32 to vector<8x128xf32>
    %13 = arith.addf %12, %11 : vector<8x128xf32>
    %14 = arith.divf %12, %13 : vector<8x128xf32>
    %c0_11 = arith.constant 0 : index
    %c128 = arith.constant 128 : index
    %15 = vector.load %arg3[%c0_11, %c128] : memref<3x256xf32, #tpu.memory_space<vmem>>, vector<3x128xf32>
    %cst_12 = arith.constant dense<0.000000e+00> : vector<8x128xf32>
    %16 = tpu.matmul %0, %15, %cst_12 {dimension_numbers = #tpu.dot_dimension_numbers<[1], [0], [0], [1], [0, 0, 1, 1], [], []>} : vector<8x3xf32>, vector<3x128xf32>, vector<8x128xf32> -> vector<8x128xf32>
    %c0_13 = arith.constant 0 : index
    %c128_14 = arith.constant 128 : index
    %17 = vector.load %arg4[%c0_13, %c128_14] : memref<20x256xf32, #tpu.memory_space<vmem>>, vector<20x128xf32>
    %cst_15 = arith.constant dense<0.000000e+00> : vector<8x128xf32>
    %18 = tpu.matmul %1, %17, %cst_15 {dimension_numbers = #tpu.dot_dimension_numbers<[1], [0], [0], [1], [0, 0, 1, 1], [], []>} : vector<8x20xf32>, vector<20x128xf32>, vector<8x128xf32> -> vector<8x128xf32>
    %19 = arith.addf %16, %18 : vector<8x128xf32>
    %c0_16 = arith.constant 0 : index
    %c128_17 = arith.constant 128 : index
    %20 = vector.load %arg5[%c0_16, %c128_17] : memref<1x256xf32, #tpu.memory_space<vmem>>, vector<1x128xf32>
    %21 = vector.broadcast %20 : vector<1x128xf32> to vector<8x128xf32>
    %22 = arith.addf %19, %21 : vector<8x128xf32>
    %c0_18 = arith.constant 0 : index
    %c0_19 = arith.constant 0 : index
    %23 = vector.load %arg6[%c0_18, %c0_19] : memref<128x128xf32, #tpu.memory_space<vmem>>, vector<128x128xf32>
    %cst_20 = arith.constant dense<0.000000e+00> : vector<8x128xf32>
    %24 = tpu.matmul %14, %23, %cst_20 {dimension_numbers = #tpu.dot_dimension_numbers<[1], [0], [0], [1], [0, 0, 1, 1], [], []>} : vector<8x128xf32>, vector<128x128xf32>, vector<8x128xf32> -> vector<8x128xf32>
    %25 = arith.addf %22, %24 : vector<8x128xf32>
    %26 = arith.negf %25 : vector<8x128xf32>
    %27 = math.exp %26 : vector<8x128xf32>
    %cst_21 = arith.constant 1.000000e+00 : f32
    %28 = vector.broadcast %cst_21 : f32 to vector<8x128xf32>
    %29 = arith.addf %28, %27 : vector<8x128xf32>
    %30 = arith.divf %28, %29 : vector<8x128xf32>
    %c0_22 = arith.constant 0 : index
    %c0_23 = arith.constant 0 : index
    %31 = vector.load %arg7[%c0_22, %c0_23] : memref<8x128xf32, #tpu.memory_space<vmem>>, vector<8x128xf32>
    tpu.vector_store %arg7[%c0_22, %c0_23], %14 {strides = array<i32>} : memref<8x128xf32, #tpu.memory_space<vmem>>, vector<8x128xf32>,
    %c0_24 = arith.constant 0 : index
    %c0_25 = arith.constant 0 : index
    %32 = vector.load %arg8[%c0_24, %c0_25] : memref<8x128xf32, #tpu.memory_space<vmem>>, vector<8x128xf32>
    tpu.vector_store %arg8[%c0_24, %c0_25], %30 {strides = array<i32>} : memref<8x128xf32, #tpu.memory_space<vmem>>, vector<8x128xf32>,
    return
  }
  func.func @transform_0(%arg0: i32) -> (i32, i32) {
    %c0_i32 = arith.constant 0 : i32
    %c0_i32_0 = arith.constant 0 : i32
    return %arg0, %c0_i32 : i32, i32
  }
  func.func @transform_1(%arg0: i32) -> (i32, i32) {
    %c0_i32 = arith.constant 0 : i32
    %c0_i32_0 = arith.constant 0 : i32
    return %arg0, %c0_i32 : i32, i32
  }
  func.func @transform_2(%arg0: i32) -> (i32, i32) {
    %c0_i32 = arith.constant 0 : i32
    %c0_i32_0 = arith.constant 0 : i32
    %c0_i32_1 = arith.constant 0 : i32
    return %c0_i32, %c0_i32_0 : i32, i32
  }
  func.func @transform_3(%arg0: i32) -> (i32, i32) {
    %c0_i32 = arith.constant 0 : i32
    %c0_i32_0 = arith.constant 0 : i32
    %c0_i32_1 = arith.constant 0 : i32
    return %c0_i32, %c0_i32_0 : i32, i32
  }
  func.func @transform_4(%arg0: i32) -> (i32, i32) {
    %c0_i32 = arith.constant 0 : i32
    %c0_i32_0 = arith.constant 0 : i32
    %c0_i32_1 = arith.constant 0 : i32
    return %c0_i32, %c0_i32_0 : i32, i32
  }
  func.func @transform_5(%arg0: i32) -> (i32, i32) {
    %c0_i32 = arith.constant 0 : i32
    %c0_i32_0 = arith.constant 0 : i32
    %c0_i32_1 = arith.constant 0 : i32
    return %c0_i32, %c0_i32_0 : i32, i32
  }
  func.func @transform_6(%arg0: i32) -> (i32, i32) {
    %c0_i32 = arith.constant 0 : i32
    %c0_i32_0 = arith.constant 0 : i32
    return %arg0, %c0_i32 : i32, i32
  }
  func.func @transform_7(%arg0: i32) -> (i32, i32) {
    %c0_i32 = arith.constant 0 : i32
    %c0_i32_0 = arith.constant 0 : i32
    return %arg0, %c0_i32 : i32, i32
  }
}

</mosaic_0001>

<llo_original>
// kernel: pass_cell_2.1
$region0: #{pass_cell_2.1}
  #allocation0 [shape = 'u32[]', space=smem, size = 0x4, offset = 0x4, fixed_abs, tag = 'smem constant byte address 0x4 - core index']
  #allocation1 [shape = 'u32[144,128]{1,0:T(1,128)}', space=vmem, size = 0x12000, scoped, tag = 'internal scratch']
  %s0 = inlined_call_operand.vmem [shape: f32[8,3], index: 0, kind: input, shape index: {}]
  %s1 = inlined_call_operand.vmem [shape: f32[8,20], index: 1, kind: input, shape index: {}]
  %s2 = inlined_call_operand.vmem [shape: f32[3,256], index: 2, kind: input, shape index: {}]
  %s3 = inlined_call_operand.hbm [shape: f32[20,256], index: 3, kind: input, shape index: {}]
  %s4 = inlined_call_operand.vmem [shape: f32[1,256], index: 4, kind: input, shape index: {}]
  %s5 = inlined_call_operand.hbm [shape: f32[128,128], index: 5, kind: input, shape index: {}]
  %s6 = inlined_call_operand.hbm [shape: f32[8,128], index: 6, kind: output, shape index: {0}]
  %s7 = inlined_call_operand.hbm [shape: f32[8,128], index: 7, kind: output, shape index: {1}]
  %8 = xla_tuple %s6, %s7
  %s9 = sld [smem:[#allocation0]]
  $region50: #{pass_cell_2.1} parent=0
    _
  %s11 = ssub.s32 1, %s9
  %s12 = scalar_select 0, %s11, %s9
  $region1: #{pass_cell_2.1} parent=0
    #allocation2 [shape = 'u8[24576]{0}', space=vmem, size = 0x6000, scoped, tag = 'input window, operand 3, single buffered']
    #allocation3 [shape = 's32[1]{0}', space=sflag, size = 0x4, scoped, tag = 'scoped memory for pass_cell_2.1']
    #allocation4 [shape = 's32[1]{0}', space=sflag, size = 0x4, scoped, tag = 'scoped memory for pass_cell_2.1']
    #allocation5 [shape = 'u8[65536]{0}', space=vmem, size = 0x10000, scoped, tag = 'input window, operand 5, single buffered']
    #allocation6 [shape = 's32[1]{0}', space=sflag, size = 0x4, scoped, tag = 'scoped memory for pass_cell_2.1']
    #allocation7 [shape = 'u8[4096]{0}', space=vmem, size = 0x1000, scoped, tag = 'output window, operand 0, single buffered']
    #allocation8 [shape = 'u8[4096]{0}', space=vmem, size = 0x1000, scoped, tag = 'output window, operand 1, single buffered']
    #allocation9 [shape = 's32[1]{0}', space=sflag, size = 0x4, scoped, tag = 'scoped memory for pass_cell_2.1']
    %13 = vsyncpa [#allocation3], 0
    %14 = vsyncpa [#allocation6], 0
    %15 = vsyncpa [#allocation4], 0
    %16 = vsyncpa [#allocation9], 0
    // Predicated region
    $region2: #{pass_cell_2.1} parent=1 // pred_check
      _
    $region3: #{pass_cell_2.1} parent=1 // pred_check_branch
      %18 = sbr.rel (0) target = $region5
    $region4: #{pass_cell_2.1} parent=1 // pred_region
      _
    $region5: #{pass_cell_2.1} parent=1 // pred_fallthru
      _
    // Predicated region
    $region6: #{pass_cell_2.1} parent=1 // pred_check
      _
    $region7: #{pass_cell_2.1} parent=1 // pred_check_branch
      %20 = sbr.rel (0) target = $region9
    $region8: #{pass_cell_2.1} parent=1 // pred_region
      _
    $region9: #{pass_cell_2.1} parent=1 // pred_fallthru
      _
    // Predicated region
    $region10: #{pass_cell_2.1} parent=1 // pred_check
      _
    $region11: #{pass_cell_2.1} parent=1 // pred_check_branch
      %22 = sbr.rel (0) target = $region13
    $region12: #{pass_cell_2.1} parent=1 // pred_region
      _
    $region13: #{pass_cell_2.1} parent=1 // pred_fallthru
      _
    // Predicated region
    $region14: #{pass_cell_2.1} parent=1 // pred_check
      _
    $region15: #{pass_cell_2.1} parent=1 // pred_check_branch
      %24 = sbr.rel (0) target = $region17
    $region16: #{pass_cell_2.1} parent=1 // pred_region
      %s26 = ssub.s32 768, 768
      %27 = vsyncadd [#allocation3], %s26
      %s28 = sshll.u32 [#allocation2], 4
      %s29 = int_to_ptr.vmem [resolvable:$true] %s28
      %34 = dma.hbm_to_vmem [thread:$0]  %s3, 768, %s29, [#allocation3], 256, 256, 16
    $region17: #{pass_cell_2.1} parent=1 // pred_fallthru
      _
    // Predicated region
    $region18: #{pass_cell_2.1} parent=1 // pred_check
      _
    $region19: #{pass_cell_2.1} parent=1 // pred_check_branch
      %36 = sbr.rel (0) target = $region21
    $region20: #{pass_cell_2.1} parent=1 // pred_region
      _
    $region21: #{pass_cell_2.1} parent=1 // pred_fallthru
      _
    // Predicated region
    $region22: #{pass_cell_2.1} parent=1 // pred_check
      _
    $region23: #{pass_cell_2.1} parent=1 // pred_check_branch
      %38 = sbr.rel (0) target = $region25
    $region24: #{pass_cell_2.1} parent=1 // pred_region
      %s40 = ssub.s32 2048, 2048
      %41 = vsyncadd [#allocation6], %s40
      %s42 = sshll.u32 [#allocation5], 4
      %s43 = int_to_ptr.vmem [resolvable:$true] %s42
      %48 = dma.hbm_to_vmem [thread:$0]  %s5, 2048, %s43, [#allocation6], 128, 128, 8
    $region25: #{pass_cell_2.1} parent=1 // pred_fallthru
      _
    // Predicated region
    $region26: #{pass_cell_2.1} parent=1 // pred_check
      _
    $region27: #{pass_cell_2.1} parent=1 // pred_check_branch
      %50 = sbr.rel (0) target = $region29
    $region28: #{pass_cell_2.1} parent=1 // pred_region
      %51 = dma.done [#allocation3], 768
    $region29: #{pass_cell_2.1} parent=1 // pred_fallthru
      _
    // Predicated region
    $region30: #{pass_cell_2.1} parent=1 // pred_check
      _
    $region31: #{pass_cell_2.1} parent=1 // pred_check_branch
      %53 = sbr.rel (0) target = $region33
    $region32: #{pass_cell_2.1} parent=1 // pred_region
      %54 = dma.done [#allocation6], 2048
    $region33: #{pass_cell_2.1} parent=1 // pred_fallthru
      _
    %v55 = vld [vmem:[%s0] sm:$0xff]
    %v56 = vld [vmem:[%s1] sm:$0xff]
    %v57 = vld [vmem:[%s2] sm:$0x7]
    %v58 = vld [vmem:[#allocation2] sm:$0xff]
    %v59 = vld [vmem:[#allocation2 + $0x10] sm:$0xff]
    %v60 = vld [vmem:[#allocation2 + $0x20] sm:$0xf]
    %vm61 = vcmask 162816
    %v63 = vsel %vm61, %v56, 0
    %vm65 = vcmask 1043456
    %v67 = vsel %vm65, %v60, 0
    %69 = vmatprep.subr.mxu0 0.0
    %70 = vmatpush1.msra.mxu0 %v58
    %71 = vmatprep.subr.mxu0 0.0
    %72 = vmatpush1.msra.mxu0 %v59
    %73 = vmatprep.subr.mxu0 0.0
    %74 = vmatpush1.msra.mxu0 %v67
    %75 = vmatprep.subr.mxu0 0.0
    %76 = vmatpush1.msra.mxu0 0.0
    %77 = vmatprep.subr.mxu0 0.0
    %78 = vmatpush1.msra.mxu0 0.0
    %79 = vmatprep.subr.mxu0 0.0
    %80 = vmatpush1.msra.mxu0 0.0
    %81 = vmatprep.subr.mxu0 0.0
    %82 = vmatpush1.msra.mxu0 0.0
    %83 = vmatprep.subr.mxu0 0.0
    %84 = vmatpush1.msra.mxu0 0.0
    %85 = vmatprep.subr.mxu0 0.0
    %86 = vmatpush1.msra.mxu0 0.0
    %87 = vmatprep.subr.mxu0 0.0
    %88 = vmatpush1.msra.mxu0 0.0
    %89 = vmatprep.subr.mxu0 0.0
    %90 = vmatpush1.msra.mxu0 0.0
    %91 = vmatprep.subr.mxu0 0.0
    %92 = vmatpush1.msra.mxu0 0.0
    %93 = vmatprep.subr.mxu0 0.0
    %94 = vmatpush1.msra.mxu0 0.0
    %95 = vmatprep.subr.mxu0 0.0
    %96 = vmatpush1.msra.mxu0 0.0
    %97 = vmatprep.subr.mxu0 0.0
    %98 = vmatpush1.msra.mxu0 0.0
    %99 = vmatprep.subr.mxu0 0.0
    %100 = vmatpush1.msra.mxu0 0.0
    %101 = vmatprep.subr.mxu0 0.0
    %102 = vmatpush1.msra.mxu0 0.0
    %103 = vmatprep.subr.mxu0 0.0
    %104 = vmatpush1.msra.mxu0 0.0
    %105 = vmatprep.subr.mxu0 0.0
    %106 = vmatpush1.msra.mxu0 0.0
    %107 = vmatprep.subr.mxu0 0.0
    %108 = vmatpush1.msra.mxu0 0.0
    %109 = vmatprep.subr.mxu0 0.0
    %110 = vmatpush1.msra.mxu0 0.0
    %111 = vmatprep.subr.mxu0 0.0
    %112 = vmatpush1.msra.mxu0 0.0
    %113 = vmatprep.subr.mxu0 0.0
    %114 = vmatpush1.msra.mxu0 0.0
    %115 = vmatprep.subr.mxu0 0.0
    %116 = vmatpush1.msra.mxu0 0.0
    %117 = vmatprep.subr.mxu0 0.0
    %118 = vmatpush1.msra.mxu0 0.0
    %119 = vmatprep.subr.mxu0 0.0
    %120 = vmatpush1.msra.mxu0 0.0
    %121 = vmatprep.subr.mxu0 0.0
    %122 = vmatpush1.msra.mxu0 0.0
    %123 = vmatprep.subr.mxu0 0.0
    %124 = vmatpush1.msra.mxu0 0.0
    %125 = vmatprep.subr.mxu0 0.0
    %126 = vmatpush1.msra.mxu0 0.0
    %127 = vmatprep.subr.mxu0 0.0
    %128 = vmatpush1.msra.mxu0 0.0
    %129 = vmatprep.subr.mxu0 0.0
    %130 = vmatpush1.msra.mxu0 0.0
    %131 = vmatprep.subr.mxu0 0.0
    %132 = vmatpush1.msra.mxu0 0.0
    %133 = vmatprep.mubr.f32.mxu0 0.0
    %134 = vmatmul.mubr.f32.gmra.mrb[0].mxu0 %v63
    %v135 = vpop.f32.mrb[0].mxu0
    %v136 = vadd.f32 0.0, %v135
    %v137 = vpop.f32.mrb[0].mxu0
    %138 = vdwg.mxu0
    %vm139 = vcmask 23552
    %v141 = vsel %vm139, %v55, 0
    %vm143 = vcmask 1042432
    %v145 = vsel %vm143, %v57, 0
    %147 = vmatprep.subr.mxu0 0.0
    %148 = vmatpush1.msra.mxu0 %v145
    %149 = vmatprep.subr.mxu0 0.0
    %150 = vmatpush1.msra.mxu0 0.0
    %151 = vmatprep.subr.mxu0 0.0
    %152 = vmatpush1.msra.mxu0 0.0
    %153 = vmatprep.subr.mxu0 0.0
    %154 = vmatpush1.msra.mxu0 0.0
    %155 = vmatprep.subr.mxu0 0.0
    %156 = vmatpush1.msra.mxu0 0.0
    %157 = vmatprep.subr.mxu0 0.0
    %158 = vmatpush1.msra.mxu0 0.0
    %159 = vmatprep.subr.mxu0 0.0
    %160 = vmatpush1.msra.mxu0 0.0
    %161 = vmatprep.subr.mxu0 0.0
    %162 = vmatpush1.msra.mxu0 0.0
    %163 = vmatprep.subr.mxu0 0.0
    %164 = vmatpush1.msra.mxu0 0.0
    %165 = vmatprep.subr.mxu0 0.0
    %166 = vmatpush1.msra.mxu0 0.0
    %167 = vmatprep.subr.mxu0 0.0
    %168 = vmatpush1.msra.mxu0 0.0
    %169 = vmatprep.subr.mxu0 0.0
    %170 = vmatpush1.msra.mxu0 0.0
    %171 = vmatprep.subr.mxu0 0.0
    %172 = vmatpush1.msra.mxu0 0.0
    %173 = vmatprep.subr.mxu0 0.0
    %174 = vmatpush1.msra.mxu0 0.0
    %175 = vmatprep.subr.mxu0 0.0
    %176 = vmatpush1.msra.mxu0 0.0
    %177 = vmatprep.subr.mxu0 0.0
    %178 = vmatpush1.msra.mxu0 0.0
    %179 = vmatprep.subr.mxu0 0.0
    %180 = vmatpush1.msra.mxu0 0.0
    %181 = vmatprep.subr.mxu0 0.0
    %182 = vmatpush1.msra.mxu0 0.0
    %183 = vmatprep.subr.mxu0 0.0
    %184 = vmatpush1.msra.mxu0 0.0
    %185 = vmatprep.subr.mxu0 0.0
    %186 = vmatpush1.msra.mxu0 0.0
    %187 = vmatprep.subr.mxu0 0.0
    %188 = vmatpush1.msra.mxu0 0.0
    %189 = vmatprep.subr.mxu0 0.0
    %190 = vmatpush1.msra.mxu0 0.0
    %191 = vmatprep.subr.mxu0 0.0
    %192 = vmatpush1.msra.mxu0 0.0
    %193 = vmatprep.subr.mxu0 0.0
    %194 = vmatpush1.msra.mxu0 0.0
    %195 = vmatprep.subr.mxu0 0.0
    %196 = vmatpush1.msra.mxu0 0.0
    %197 = vmatprep.subr.mxu0 0.0
    %198 = vmatpush1.msra.mxu0 0.0
    %199 = vmatprep.subr.mxu0 0.0
    %200 = vmatpush1.msra.mxu0 0.0
    %201 = vmatprep.subr.mxu0 0.0
    %202 = vmatpush1.msra.mxu0 0.0
    %203 = vmatprep.subr.mxu0 0.0
    %204 = vmatpush1.msra.mxu0 0.0
    %205 = vmatprep.subr.mxu0 0.0
    %206 = vmatpush1.msra.mxu0 0.0
    %207 = vmatprep.subr.mxu0 0.0
    %208 = vmatpush1.msra.mxu0 0.0
    %209 = vmatprep.subr.mxu0 0.0
    %210 = vmatpush1.msra.mxu0 0.0
    %211 = vmatprep.mubr.f32.mxu0 0.0
    %212 = vmatmul.mubr.f32.gmra.mrb[0].mxu0 %v141
    %v213 = vpop.f32.mrb[0].mxu0
    %v214 = vadd.f32 %v136, %v213
    %v215 = vpop.f32.mrb[0].mxu0
    %216 = vdwg.mxu0
    %v217 = vld [vmem:[%s4] sm:$0x1]
    %v219 = vlaneseq
    %v220 = vshrl.u32 %v219, 7
    %v221 = vsub.s32 0, %v220
    %v222 = vrot.slane %v217, %v221
    %v224 = vadd.f32 %v214, %v222
    %v225 = vxor.u32 %v224, 2147483648
    %v226 = vmul.f32 %v225, 1.442695
    %v227 = vpow.pop %v226
    %v228 = vadd.f32 %v227, 1.0
    %v229 = vrcp.pop %v228
    %v230 = vmul.f32 1.0, %v229
    %v231 = vld [vmem:[%s2 + $0x4] sm:$0x7]
    %v232 = vld [vmem:[#allocation2 + $0x8] sm:$0xff]
    %v233 = vld [vmem:[#allocation2 + $0x18] sm:$0xff]
    %v234 = vld [vmem:[#allocation2 + $0x28] sm:$0xf]
    %v236 = vsel %vm65, %v234, 0
    %238 = vmatprep.subr.mxu0 0.0
    %239 = vmatpush1.msra.mxu0 %v232
    %240 = vmatprep.subr.mxu0 0.0
    %241 = vmatpush1.msra.mxu0 %v233
    %242 = vmatprep.subr.mxu0 0.0
    %243 = vmatpush1.msra.mxu0 %v236
    %244 = vmatprep.subr.mxu0 0.0
    %245 = vmatpush1.msra.mxu0 0.0
    %246 = vmatprep.subr.mxu0 0.0
    %247 = vmatpush1.msra.mxu0 0.0
    %248 = vmatprep.subr.mxu0 0.0
    %249 = vmatpush1.msra.mxu0 0.0
    %250 = vmatprep.subr.mxu0 0.0
    %251 = vmatpush1.msra.mxu0 0.0
    %252 = vmatprep.subr.mxu0 0.0
    %253 = vmatpush1.msra.mxu0 0.0
    %254 = vmatprep.subr.mxu0 0.0
    %255 = vmatpush1.msra.mxu0 0.0
    %256 = vmatprep.subr.mxu0 0.0
    %257 = vmatpush1.msra.mxu0 0.0
    %258 = vmatprep.subr.mxu0 0.0
    %259 = vmatpush1.msra.mxu0 0.0
    %260 = vmatprep.subr.mxu0 0.0
    %261 = vmatpush1.msra.mxu0 0.0
    %262 = vmatprep.subr.mxu0 0.0
    %263 = vmatpush1.msra.mxu0 0.0
    %264 = vmatprep.subr.mxu0 0.0
    %265 = vmatpush1.msra.mxu0 0.0
    %266 = vmatprep.subr.mxu0 0.0
    %267 = vmatpush1.msra.mxu0 0.0
    %268 = vmatprep.subr.mxu0 0.0
    %269 = vmatpush1.msra.mxu0 0.0
    %270 = vmatprep.subr.mxu0 0.0
    %271 = vmatpush1.msra.mxu0 0.0
    %272 = vmatprep.subr.mxu0 0.0
    %273 = vmatpush1.msra.mxu0 0.0
    %274 = vmatprep.subr.mxu0 0.0
    %275 = vmatpush1.msra.mxu0 0.0
    %276 = vmatprep.subr.mxu0 0.0
    %277 = vmatpush1.msra.mxu0 0.0
    %278 = vmatprep.subr.mxu0 0.0
    %279 = vmatpush1.msra.mxu0 0.0
    %280 = vmatprep.subr.mxu0 0.0
    %281 = vmatpush1.msra.mxu0 0.0
    %282 = vmatprep.subr.mxu0 0.0
    %283 = vmatpush1.msra.mxu0 0.0
    %284 = vmatprep.subr.mxu0 0.0
    %285 = vmatpush1.msra.mxu0 0.0
    %286 = vmatprep.subr.mxu0 0.0
    %287 = vmatpush1.msra.mxu0 0.0
    %288 = vmatprep.subr.mxu0 0.0
    %289 = vmatpush1.msra.mxu0 0.0
    %290 = vmatprep.subr.mxu0 0.0
    %291 = vmatpush1.msra.mxu0 0.0
    %292 = vmatprep.subr.mxu0 0.0
    %293 = vmatpush1.msra.mxu0 0.0
    %294 = vmatprep.subr.mxu0 0.0
    %295 = vmatpush1.msra.mxu0 0.0
    %296 = vmatprep.subr.mxu0 0.0
    %297 = vmatpush1.msra.mxu0 0.0
    %298 = vmatprep.subr.mxu0 0.0
    %299 = vmatpush1.msra.mxu0 0.0
    %300 = vmatprep.subr.mxu0 0.0
    %301 = vmatpush1.msra.mxu0 0.0
    %302 = vmatprep.mubr.f32.mxu0 0.0
    %303 = vmatmul.mubr.f32.gmra.mrb[0].mxu0 %v63
    %v304 = vpop.f32.mrb[0].mxu0
    %v305 = vadd.f32 0.0, %v304
    %v306 = vpop.f32.mrb[0].mxu0
    %307 = vdwg.mxu0
    %v309 = vsel %vm143, %v231, 0
    %311 = vmatprep.subr.mxu0 0.0
    %312 = vmatpush1.msra.mxu0 %v309
    %313 = vmatprep.subr.mxu0 0.0
    %314 = vmatpush1.msra.mxu0 0.0
    %315 = vmatprep.subr.mxu0 0.0
    %316 = vmatpush1.msra.mxu0 0.0
    %317 = vmatprep.subr.mxu0 0.0
    %318 = vmatpush1.msra.mxu0 0.0
    %319 = vmatprep.subr.mxu0 0.0
    %320 = vmatpush1.msra.mxu0 0.0
    %321 = vmatprep.subr.mxu0 0.0
    %322 = vmatpush1.msra.mxu0 0.0
    %323 = vmatprep.subr.mxu0 0.0
    %324 = vmatpush1.msra.mxu0 0.0
    %325 = vmatprep.subr.mxu0 0.0
    %326 = vmatpush1.msra.mxu0 0.0
    %327 = vmatprep.subr.mxu0 0.0
    %328 = vmatpush1.msra.mxu0 0.0
    %329 = vmatprep.subr.mxu0 0.0
    %330 = vmatpush1.msra.mxu0 0.0
    %331 = vmatprep.subr.mxu0 0.0
    %332 = vmatpush1.msra.mxu0 0.0
    %333 = vmatprep.subr.mxu0 0.0
    %334 = vmatpush1.msra.mxu0 0.0
    %335 = vmatprep.subr.mxu0 0.0
    %336 = vmatpush1.msra.mxu0 0.0
    %337 = vmatprep.subr.mxu0 0.0
    %338 = vmatpush1.msra.mxu0 0.0
    %339 = vmatprep.subr.mxu0 0.0
    %340 = vmatpush1.msra.mxu0 0.0
    %341 = vmatprep.subr.mxu0 0.0
    %342 = vmatpush1.msra.mxu0 0.0
    %343 = vmatprep.subr.mxu0 0.0
    %344 = vmatpush1.msra.mxu0 0.0
    %345 = vmatprep.subr.mxu0 0.0
    %346 = vmatpush1.msra.mxu0 0.0
    %347 = vmatprep.subr.mxu0 0.0
    %348 = vmatpush1.msra.mxu0 0.0
    %349 = vmatprep.subr.mxu0 0.0
    %350 = vmatpush1.msra.mxu0 0.0
    %351 = vmatprep.subr.mxu0 0.0
    %352 = vmatpush1.msra.mxu0 0.0
    %353 = vmatprep.subr.mxu0 0.0
    %354 = vmatpush1.msra.mxu0 0.0
    %355 = vmatprep.subr.mxu0 0.0
    %356 = vmatpush1.msra.mxu0 0.0
    %357 = vmatprep.subr.mxu0 0.0
    %358 = vmatpush1.msra.mxu0 0.0
    %359 = vmatprep.subr.mxu0 0.0
    %360 = vmatpush1.msra.mxu0 0.0
    %361 = vmatprep.subr.mxu0 0.0
    %362 = vmatpush1.msra.mxu0 0.0
    %363 = vmatprep.subr.mxu0 0.0
    %364 = vmatpush1.msra.mxu0 0.0
    %365 = vmatprep.subr.mxu0 0.0
    %366 = vmatpush1.msra.mxu0 0.0
    %367 = vmatprep.subr.mxu0 0.0
    %368 = vmatpush1.msra.mxu0 0.0
    %369 = vmatprep.subr.mxu0 0.0
    %370 = vmatpush1.msra.mxu0 0.0
    %371 = vmatprep.subr.mxu0 0.0
    %372 = vmatpush1.msra.mxu0 0.0
    %373 = vmatprep.subr.mxu0 0.0
    %374 = vmatpush1.msra.mxu0 0.0
    %375 = vmatprep.mubr.f32.mxu0 0.0
    %376 = vmatmul.mubr.f32.gmra.mrb[0].mxu0 %v141
    %v377 = vpop.f32.mrb[0].mxu0
    %v378 = vadd.f32 %v305, %v377
    %v379 = vpop.f32.mrb[0].mxu0
    %380 = vdwg.mxu0
    %v381 = vld [vmem:[%s4 + $0x1] sm:$0x1]
    %v383 = vlaneseq
    %v384 = vshrl.u32 %v383, 7
    %v385 = vsub.s32 0, %v384
    %v386 = vrot.slane %v381, %v385
    %v388 = vadd.f32 %v378, %v386
    %v389 = vld [vmem:[#allocation5] sm:$0xff]
    %v390 = vld [vmem:[#allocation5 + $0x8] sm:$0xff]
    %v391 = vld [vmem:[#allocation5 + $0x10] sm:$0xff]
    %v392 = vld [vmem:[#allocation5 + $0x18] sm:$0xff]
    %v393 = vld [vmem:[#allocation5 + $0x20] sm:$0xff]
    %v394 = vld [vmem:[#allocation5 + $0x28] sm:$0xff]
    %v395 = vld [vmem:[#allocation5 + $0x30] sm:$0xff]
    %v396 = vld [vmem:[#allocation5 + $0x38] sm:$0xff]
    %v397 = vld [vmem:[#allocation5 + $0x40] sm:$0xff]
    %v398 = vld [vmem:[#allocation5 + $0x48] sm:$0xff]
    %v399 = vld [vmem:[#allocation5 + $0x50] sm:$0xff]
    %v400 = vld [vmem:[#allocation5 + $0x58] sm:$0xff]
    %v401 = vld [vmem:[#allocation5 + $0x60] sm:$0xff]
    %v402 = vld [vmem:[#allocation5 + $0x68] sm:$0xff]
    %v403 = vld [vmem:[#allocation5 + $0x70] sm:$0xff]
    %v404 = vld [vmem:[#allocation5 + $0x78] sm:$0xff]
    %405 = vmatprep.subr.mxu0 0.0
    %406 = vmatpush1.msra.mxu0 %v389
    %407 = vmatprep.subr.mxu0 0.0
    %408 = vmatpush1.msra.mxu0 %v390
    %409 = vmatprep.subr.mxu0 0.0
    %410 = vmatpush1.msra.mxu0 %v391
    %411 = vmatprep.subr.mxu0 0.0
    %412 = vmatpush1.msra.mxu0 %v392
    %413 = vmatprep.subr.mxu0 0.0
    %414 = vmatpush1.msra.mxu0 %v393
    %415 = vmatprep.subr.mxu0 0.0
    %416 = vmatpush1.msra.mxu0 %v394
    %417 = vmatprep.subr.mxu0 0.0
    %418 = vmatpush1.msra.mxu0 %v395
    %419 = vmatprep.subr.mxu0 0.0
    %420 = vmatpush1.msra.mxu0 %v396
    %421 = vmatprep.subr.mxu0 0.0
    %422 = vmatpush1.msra.mxu0 %v397
    %423 = vmatprep.subr.mxu0 0.0
    %424 = vmatpush1.msra.mxu0 %v398
    %425 = vmatprep.subr.mxu0 0.0
    %426 = vmatpush1.msra.mxu0 %v399
    %427 = vmatprep.subr.mxu0 0.0
    %428 = vmatpush1.msra.mxu0 %v400
    %429 = vmatprep.subr.mxu0 0.0
    %430 = vmatpush1.msra.mxu0 %v401
    %431 = vmatprep.subr.mxu0 0.0
    %432 = vmatpush1.msra.mxu0 %v402
    %433 = vmatprep.subr.mxu0 0.0
    %434 = vmatpush1.msra.mxu0 %v403
    %435 = vmatprep.subr.mxu0 0.0
    %436 = vmatpush1.msra.mxu0 %v404
    %437 = vmatprep.subr.mxu0 0.0
    %438 = vmatpush1.msra.mxu0 0.0
    %439 = vmatprep.subr.mxu0 0.0
    %440 = vmatpush1.msra.mxu0 0.0
    %441 = vmatprep.subr.mxu0 0.0
    %442 = vmatpush1.msra.mxu0 0.0
    %443 = vmatprep.subr.mxu0 0.0
    %444 = vmatpush1.msra.mxu0 0.0
    %445 = vmatprep.subr.mxu0 0.0
    %446 = vmatpush1.msra.mxu0 0.0
    %447 = vmatprep.subr.mxu0 0.0
    %448 = vmatpush1.msra.mxu0 0.0
    %449 = vmatprep.subr.mxu0 0.0
    %450 = vmatpush1.msra.mxu0 0.0
    %451 = vmatprep.subr.mxu0 0.0
    %452 = vmatpush1.msra.mxu0 0.0
    %453 = vmatprep.subr.mxu0 0.0
    %454 = vmatpush1.msra.mxu0 0.0
    %455 = vmatprep.subr.mxu0 0.0
    %456 = vmatpush1.msra.mxu0 0.0
    %457 = vmatprep.subr.mxu0 0.0
    %458 = vmatpush1.msra.mxu0 0.0
    %459 = vmatprep.subr.mxu0 0.0
    %460 = vmatpush1.msra.mxu0 0.0
    %461 = vmatprep.subr.mxu0 0.0
    %462 = vmatpush1.msra.mxu0 0.0
    %463 = vmatprep.subr.mxu0 0.0
    %464 = vmatpush1.msra.mxu0 0.0
    %465 = vmatprep.subr.mxu0 0.0
    %466 = vmatpush1.msra.mxu0 0.0
    %467 = vmatprep.subr.mxu0 0.0
    %468 = vmatpush1.msra.mxu0 0.0
    %469 = vmatprep.mubr.f32.mxu0 0.0
    %470 = vmatmul.mubr.f32.gmra.mrb[0].mxu0 %v230
    %v471 = vpop.f32.mrb[0].mxu0
    %v472 = vadd.f32 0.0, %v471
    %v473 = vpop.f32.mrb[0].mxu0
    %474 = vdwg.mxu0
    %v475 = vadd.f32 %v388, %v472
    %v476 = vxor.u32 %v475, 2147483648
    %v477 = vmul.f32 %v476, 1.442695
    %v478 = vpow.pop %v477
    %v479 = vadd.f32 %v478, 1.0
    %v480 = vrcp.pop %v479
    %v481 = vmul.f32 1.0, %v480
    %482 = vst [vmem:[#allocation7] sm:$0xff] %v230
    %483 = vst [vmem:[#allocation8] sm:$0xff] %v481
    // Predicated region
    $region34: #{pass_cell_2.1} parent=1 // pred_check
      _
    $region35: #{pass_cell_2.1} parent=1 // pred_check_branch
      %485 = sbr.rel (0) target = $region37
    $region36: #{pass_cell_2.1} parent=1 // pred_region
      %s487 = ssub.s32 128, 128
      %488 = vsyncadd [#allocation4], %s487
      %s490 = sshll.u32 [#allocation7], 4
      %s491 = int_to_ptr.vmem [resolvable:$true] %s490
      %493 = dma.vmem_to_hbm [thread:$0]  %s491, 128, %s6, [#allocation4]
    $region37: #{pass_cell_2.1} parent=1 // pred_fallthru
      _
    // Predicated region
    $region38: #{pass_cell_2.1} parent=1 // pred_check
      _
    $region39: #{pass_cell_2.1} parent=1 // pred_check_branch
      %495 = sbr.rel (0) target = $region41
    $region40: #{pass_cell_2.1} parent=1 // pred_region
      %s497 = ssub.s32 128, 128
      %498 = vsyncadd [#allocation9], %s497
      %s500 = sshll.u32 [#allocation8], 4
      %s501 = int_to_ptr.vmem [resolvable:$true] %s500
      %503 = dma.vmem_to_hbm [thread:$0]  %s501, 128, %s7, [#allocation9]
    $region41: #{pass_cell_2.1} parent=1 // pred_fallthru
      _
    // Predicated region
    $region42: #{pass_cell_2.1} parent=1 // pred_check
      _
    $region43: #{pass_cell_2.1} parent=1 // pred_check_branch
      %505 = sbr.rel (0) target = $region45
    $region44: #{pass_cell_2.1} parent=1 // pred_region
      %506 = dma.done [#allocation4], 128
    $region45: #{pass_cell_2.1} parent=1 // pred_fallthru
      _
    // Predicated region
    $region46: #{pass_cell_2.1} parent=1 // pred_check
      _
    $region47: #{pass_cell_2.1} parent=1 // pred_check_branch
      %508 = sbr.rel (0) target = $region49
    $region48: #{pass_cell_2.1} parent=1 // pred_region
      %509 = dma.done [#allocation9], 128
    $region49: #{pass_cell_2.1} parent=1 // pred_fallthru
      _
    %510 = vsyncpa [#allocation3], 1
    %511 = vsyncpa [#allocation6], 1
    %512 = vsyncpa [#allocation4], 1
    %513 = vsyncpa [#allocation9], 1

</llo_original>
